<compile_context>
chip_gen: v7x
topology: tpu7x:2x2x1
jax: 0.10.0
libtpu: 0.0.40
codegen_flags: <defaults>
</compile_context>

<pallas_src>
import jax
import jax.numpy as jnp
from jax.experimental import pallas as pl
from jax.experimental.pallas import tpu as pltpu


def _bn_relu_kernel(x_ref, scale_ref, shift_ref, o_ref):
    # x_ref : (tr, thw)    scale_ref/shift_ref : (tr, 1)   o_ref : (tr, thw)
    y = x_ref[...] * scale_ref[...] + shift_ref[...]
    o_ref[...] = jnp.maximum(y, 0.0)


def fused_bn_relu_2d(x_nchw, weight, bias, running_mean, running_var, eps=1e-5):
    """Inference-mode fused BatchNorm2d + ReLU (NCHW in, NCHW out)."""
    N, C, H, W = x_nchw.shape
    rows = N * C
    hw = H * W

    # Free reshape: NCHW -> (N*C, H*W); H*W is the lane (fast) axis.
    x2d = x_nchw.reshape(rows, hw)

    # Fold the 4 per-channel params into per-row scale/shift (row r -> channel r % C).
    inv_std = jax.lax.rsqrt(running_var.astype(jnp.float32) + eps)
    scale_c = weight.astype(jnp.float32) * inv_std                    # (C,)
    shift_c = bias.astype(jnp.float32) - running_mean.astype(jnp.float32) * scale_c
    scale_rows = jnp.tile(scale_c, N).reshape(rows, 1).astype(x2d.dtype)
    shift_rows = jnp.tile(shift_c, N).reshape(rows, 1).astype(x2d.dtype)

    # Tile selection:
    #   lane tile: multiple of 128, capped at 2048 (covers hw with padded last block)
    #   row tile : multiple of 8,   capped at 512
    # Max x tile = 512*2048*4B = 4 MiB; double-buffered in+out ~= 16 MiB (< 32 MiB
    # scoped default and well under v7x's 64 MiB physical VMEM).
    thw = min(2048, 128 * pl.cdiv(hw, 128))
    tr = min(512, 8 * pl.cdiv(rows, 8))
    grid = (pl.cdiv(rows, tr), pl.cdiv(hw, thw))

    out2d = pl.pallas_call(
        _bn_relu_kernel,
        out_shape=jax.ShapeDtypeStruct((rows, hw), x2d.dtype),
        grid=grid,
        in_specs=[
            pl.BlockSpec((tr, thw), lambda i, j: (i, j)),   # x tile
            pl.BlockSpec((tr, 1), lambda i, j: (i, 0)),     # per-row scale
            pl.BlockSpec((tr, 1), lambda i, j: (i, 0)),     # per-row shift
        ],
        out_specs=pl.BlockSpec((tr, thw), lambda i, j: (i, j)),
        compiler_params=pltpu.CompilerParams(
            dimension_semantics=("parallel", "parallel"),
            vmem_limit_bytes=48 * 1024 * 1024,
        ),
    )(x2d, scale_rows, shift_rows)

    # Free reshape back to NCHW.
    return out2d.reshape(N, C, H, W)


if __name__ == "__main__":
    key = jax.random.PRNGKey(0)
    N, C, H, W = 2, 4, 16, 16
    eps = 1e-5

    kx, km, kv = jax.random.split(key, 3)
    x = jax.random.normal(kx, (N, C, H, W), dtype=jnp.float32)

    # Module __init__ defaults are weight=1, bias=0, mean=0, var=1; perturb
    # deterministically so the BN math is actually exercised.
    weight = jnp.ones((C,), jnp.float32) * 1.5
    bias = jnp.arange(C, dtype=jnp.float32) * 0.1
    running_mean = jax.random.normal(km, (C,), dtype=jnp.float32) * 0.2
    running_var = jnp.abs(jax.random.normal(kv, (C,), dtype=jnp.float32)) + 0.5

    y = fused_bn_relu_2d(x, weight, bias, running_mean, running_var, eps)
    y = jax.block_until_ready(y)

    # Pure-JAX reference (inference batch norm + relu).
    inv_std = 1.0 / jnp.sqrt(running_var + eps)
    ref = (x - running_mean[None, :, None, None]) * inv_std[None, :, None, None]
    ref = ref * weight[None, :, None, None] + bias[None, :, None, None]
    ref = jnp.maximum(ref, 0.0)

    assert y.shape == x.shape and y.dtype == x.dtype
    assert jnp.allclose(y, ref, atol=1e-5, rtol=1e-5), \
        f"max err {jnp.max(jnp.abs(y - ref))}"
    print("KERNEL_OK")
</pallas_src>

<mosaic_0001>
module attributes {stable_mosaic.version = 11 : i64} {
  func.func @_bn_relu_kernel(%arg0: i32, %arg1: i32, %arg2: memref<8x256xf32, #tpu.memory_space<vmem>>, %arg3: memref<8x1xf32, #tpu.memory_space<vmem>>, %arg4: memref<8x1xf32, #tpu.memory_space<vmem>>, %arg5: memref<8x256xf32, #tpu.memory_space<vmem>>) attributes {dimension_semantics = [#tpu.dimension_semantics<parallel>, #tpu.dimension_semantics<parallel>], iteration_bounds = array<i64: 1, 1>, scalar_prefetch = 0 : i64, scratch_operands = 0 : i64, tpu.core_type = #tpu.core_type<tc>, window_params = [{transform_indices = @transform_0, window_bounds = array<i64: 8, 256>}, {transform_indices = @transform_1, window_bounds = array<i64: 8, 1>}, {transform_indices = @transform_2, window_bounds = array<i64: 8, 1>}, {transform_indices = @transform_3, window_bounds = array<i64: 8, 256>}]} {
    %c0 = arith.constant 0 : index
    %c0_0 = arith.constant 0 : index
    %0 = vector.load %arg2[%c0, %c0_0] : memref<8x256xf32, #tpu.memory_space<vmem>>, vector<8x256xf32>
    %c0_1 = arith.constant 0 : index
    %c0_2 = arith.constant 0 : index
    %1 = vector.load %arg3[%c0_1, %c0_2] : memref<8x1xf32, #tpu.memory_space<vmem>>, vector<8x1xf32>
    %2 = vector.broadcast %1 : vector<8x1xf32> to vector<8x256xf32>
    %3 = arith.mulf %0, %2 : vector<8x256xf32>
    %c0_3 = arith.constant 0 : index
    %c0_4 = arith.constant 0 : index
    %4 = vector.load %arg4[%c0_3, %c0_4] : memref<8x1xf32, #tpu.memory_space<vmem>>, vector<8x1xf32>
    %5 = vector.broadcast %4 : vector<8x1xf32> to vector<8x256xf32>
    %6 = arith.addf %3, %5 : vector<8x256xf32>
    %cst = arith.constant 0.000000e+00 : f32
    %7 = vector.broadcast %cst : f32 to vector<8x256xf32>
    %8 = arith.maximumf %6, %7 : vector<8x256xf32>
    %c0_5 = arith.constant 0 : index
    %c0_6 = arith.constant 0 : index
    %9 = vector.load %arg5[%c0_5, %c0_6] : memref<8x256xf32, #tpu.memory_space<vmem>>, vector<8x256xf32>
    tpu.vector_store %arg5[%c0_5, %c0_6], %8 {strides = array<i32>} : memref<8x256xf32, #tpu.memory_space<vmem>>, vector<8x256xf32>,
    return
  }
  func.func @transform_0(%arg0: i32, %arg1: i32) -> (i32, i32) {
    %c0_i32 = arith.constant 0 : i32
    return %arg0, %arg1 : i32, i32
  }
  func.func @transform_1(%arg0: i32, %arg1: i32) -> (i32, i32) {
    %c0_i32 = arith.constant 0 : i32
    %c0_i32_0 = arith.constant 0 : i32
    return %arg0, %c0_i32 : i32, i32
  }
  func.func @transform_2(%arg0: i32, %arg1: i32) -> (i32, i32) {
    %c0_i32 = arith.constant 0 : i32
    %c0_i32_0 = arith.constant 0 : i32
    return %arg0, %c0_i32 : i32, i32
  }
  func.func @transform_3(%arg0: i32, %arg1: i32) -> (i32, i32) {
    %c0_i32 = arith.constant 0 : i32
    return %arg0, %arg1 : i32, i32
  }
}

</mosaic_0001>

<llo_original>
// kernel: tpu_custom_call.1
$region0: #{tpu_custom_call.1}
  #allocation0 [shape = 'u32[]', space=smem, size = 0x4, offset = 0x4, fixed_abs, tag = 'smem constant byte address 0x4 - core index']
  #allocation1 [shape = 'u32[144,128]{1,0:T(1,128)}', space=vmem, size = 0x12000, scoped, tag = 'internal scratch']
  %s0 = inlined_call_operand.vmem [shape: f32[8,256], index: 0, kind: input, shape index: {}]
  %s1 = inlined_call_operand.vmem [shape: f32[8,1], index: 1, kind: input, shape index: {}]
  %s2 = inlined_call_operand.vmem [shape: f32[8,1], index: 2, kind: input, shape index: {}]
  %s3 = inlined_call_operand.hbm [shape: f32[8,256], index: 3, kind: output, shape index: {}]
  %s4 = sld [smem:[#allocation0]]
  $region22: #{tpu_custom_call.1} parent=0
    _
  %s6 = ssub.s32 1, %s4
  %s7 = scalar_select 0, %s6, %s4
  $region1: #{tpu_custom_call.1} parent=0
    #allocation2 [shape = 'u8[8192]{0}', space=vmem, size = 0x2000, scoped, tag = 'output window, operand 0, single buffered']
    #allocation3 [shape = 's32[1]{0}', space=sflag, size = 0x4, scoped, tag = 'scoped memory for tpu_custom_call.1']
    %8 = vsyncpa [#allocation3], 0
    // Predicated region
    $region2: #{tpu_custom_call.1} parent=1 // pred_check
      _
    $region3: #{tpu_custom_call.1} parent=1 // pred_check_branch
      %10 = sbr.rel (0) target = $region5
    $region4: #{tpu_custom_call.1} parent=1 // pred_region
      _
    $region5: #{tpu_custom_call.1} parent=1 // pred_fallthru
      _
    // Predicated region
    $region6: #{tpu_custom_call.1} parent=1 // pred_check
      _
    $region7: #{tpu_custom_call.1} parent=1 // pred_check_branch
      %12 = sbr.rel (0) target = $region9
    $region8: #{tpu_custom_call.1} parent=1 // pred_region
      _
    $region9: #{tpu_custom_call.1} parent=1 // pred_fallthru
      _
    // Predicated region
    $region10: #{tpu_custom_call.1} parent=1 // pred_check
      _
    $region11: #{tpu_custom_call.1} parent=1 // pred_check_branch
      %14 = sbr.rel (0) target = $region13
    $region12: #{tpu_custom_call.1} parent=1 // pred_region
      _
    $region13: #{tpu_custom_call.1} parent=1 // pred_fallthru
      _
    %v15 = vld [vmem:[%s0] sm:$0xff]
    %v16 = vld [vmem:[%s0 + $0x8] sm:$0xff]
    %v17 = vld [vmem:[%s1] sm:$0xff]
    %19 = vset.pattern.permute.xlu0 0
    %20 = vperm.xlu0 %19, %v17
    %v21 = vpop.permute.xlu0 %20
    %v23 = vmul.f32 %v15, %v21
    %v24 = vmul.f32 %v16, %v21
    %v25 = vld [vmem:[%s2] sm:$0xff]
    %27 = vset.pattern.permute.xlu0 0
    %28 = vperm.xlu0 %27, %v25
    %v29 = vpop.permute.xlu0 %28
    %v31 = vadd.f32 %v23, %v29
    %v32 = vadd.f32 %v24, %v29
    %v33 = vmax.f32 %v31, 0.0
    %v34 = vmax.f32 %v32, 0.0
    %35 = vst [vmem:[#allocation2] sm:$0xff] %v33
    %36 = vst [vmem:[#allocation2 + $0x8] sm:$0xff] %v34
    // Predicated region
    $region14: #{tpu_custom_call.1} parent=1 // pred_check
      _
    $region15: #{tpu_custom_call.1} parent=1 // pred_check_branch
      %38 = sbr.rel (0) target = $region17
    $region16: #{tpu_custom_call.1} parent=1 // pred_region
      %s40 = ssub.s32 256, 256
      %41 = vsyncadd [#allocation3], %s40
      %s43 = sshll.u32 [#allocation2], 4
      %s44 = int_to_ptr.vmem [resolvable:$true] %s43
      %46 = dma.vmem_to_hbm [thread:$0]  %s44, 256, %s3, [#allocation3]
    $region17: #{tpu_custom_call.1} parent=1 // pred_fallthru
      _
    // Predicated region
    $region18: #{tpu_custom_call.1} parent=1 // pred_check
      _
    $region19: #{tpu_custom_call.1} parent=1 // pred_check_branch
      %48 = sbr.rel (0) target = $region21
    $region20: #{tpu_custom_call.1} parent=1 // pred_region
      %49 = dma.done [#allocation3], 256
    $region21: #{tpu_custom_call.1} parent=1 // pred_fallthru
      _
    %50 = vsyncpa [#allocation3], 1

</llo_original>
